<compile_context>
chip_gen: v7x
topology: tpu7x:2x2x1
jax: 0.10.0
libtpu: 0.0.40
codegen_flags: <defaults>
</compile_context>

<pallas_src>
import functools

import numpy as np
import jax
import jax.numpy as jnp
from jax import lax
from jax.experimental import pallas as pl
from jax.experimental.pallas import tpu as pltpu


def _round_up(x, m):
    return (x + m - 1) // m * m


# ----------------------------- Pallas kernel ---------------------------------

def _stem_kernel(x_ref, w1_ref, b1_ref, w2_ref, b2_ref, o_ref, xpad_ref, h_ref,
                 *, L, RT, Rh, Cin, pad_lanes, slope):
    """One (batch, row-tile) step of the fused stem.

    x_ref   : (RT+16, Cin)        overlapped input tile, native channels.
                                  Local row r <-> original sequence row t*RT + r - 2
                                  (zero outside [0, L)).
    w1_ref  : (3, Cin_p, Cout_p)  conv1 per-tap weights (rows >= Cin are zero)
    b1_ref  : (1, Cout_p)         f32
    w2_ref  : (3, Cout_p, Cout_p) conv2 per-tap weights
    b2_ref  : (1, Cout_p)         f32
    o_ref   : (RT, Cout_p)        output rows t*RT .. t*RT+RT-1
    xpad_ref: (RT+16, Cin_p)      VMEM scratch: lane-padded input tile
    h_ref   : (Rh=RT+8, Cout_p)   VMEM scratch: conv1 activation
                                  (local row j <-> sequence position t*RT + j - 1)
    """
    t = pl.program_id(1)

    # ---- lane-pad the input inside VMEM (no 128-lane slab ever touches HBM) ----
    if pad_lanes:
        xpad_ref[...] = jnp.zeros_like(xpad_ref)
        xpad_ref[:, 0:Cin] = x_ref[...].astype(xpad_ref.dtype)
    else:
        xpad_ref[...] = x_ref[...].astype(xpad_ref.dtype)

    # ---- conv1: 3 accumulating MXU dots (no tap concatenation) ----
    acc = jnp.dot(xpad_ref[pl.ds(0, Rh), :], w1_ref[0],
                  preferred_element_type=jnp.float32)
    acc = acc + jnp.dot(xpad_ref[pl.ds(1, Rh), :], w1_ref[1],
                        preferred_element_type=jnp.float32)
    acc = acc + jnp.dot(xpad_ref[pl.ds(2, Rh), :], w1_ref[2],
                        preferred_element_type=jnp.float32)
    h = acc + b1_ref[...]                               # bias in f32
    h = jnp.where(h > 0, h, slope * h)                  # LeakyReLU in f32
    # rows outside the valid sequence act as conv2's zero padding
    j = lax.broadcasted_iota(jnp.int32, (Rh, 1), 0)
    pos = t * RT - 1 + j
    h = jnp.where((pos >= 0) & (pos < L), h, 0.0)
    h_ref[...] = h.astype(h_ref.dtype)

    # ---- conv2: 3 accumulating MXU dots ----
    out = jnp.dot(h_ref[pl.ds(0, RT), :], w2_ref[0],
                  preferred_element_type=jnp.float32)
    out = out + jnp.dot(h_ref[pl.ds(1, RT), :], w2_ref[1],
                        preferred_element_type=jnp.float32)
    out = out + jnp.dot(h_ref[pl.ds(2, RT), :], w2_ref[2],
                        preferred_element_type=jnp.float32)
    out = out + b2_ref[...]
    o_ref[...] = out.astype(o_ref.dtype)


# ----------------------------- wrapper ----------------------------------------

def stem_forward(x_blc, params, *, leaky_relu_slope=0.2, row_tile=512,
                 compute_dtype=None, unpad=True):
    """Stem.forward.  x_blc: (B, L, Cin) -> (B, L, Cout).

    compute_dtype: set to jnp.bfloat16 on v6e/v7x to halve HBM/VMEM traffic
                   (bias / accumulation / LeakyReLU remain f32).
    unpad=False  : return the lane-padded (B, L_r, Cout_p) layout so the consumer
                   can keep it end-to-end (rows >= L contain b2, lanes >= Cout are 0).
    """
    B, L, Cin = x_blc.shape
    w1, b1 = params["w1"], params["b1"]          # (Cout, Cin, 3), (Cout,)
    w2, b2 = params["w2"], params["b2"]          # (Cout, Cout, 3), (Cout,)
    Cout, K = w1.shape[0], w1.shape[-1]
    assert K == 3 and w2.shape[-1] == 3

    cdt = compute_dtype if compute_dtype is not None else x_blc.dtype
    Cin_p = _round_up(Cin, 128)                  # conv1 contraction lanes (padded in-kernel)
    Cout_p = _round_up(Cout, 128)                # lane-dense output channels

    # Row tiling: RT output rows per grid step, 2+2-row halo for the two stacked
    # k=3 convs.  Per-step VMEM is bounded and independent of L.
    RT = max(8, min(_round_up(row_tile, 8), _round_up(L, 8)))
    nT = -(-L // RT)
    L_r = nT * RT
    RTB = RT + 16                                # input rows per step (halo + 8-alignment)
    Rh = RT + 8                                  # conv1 rows computed per step

    # Zero-padded sequence at native Cin (2 leading zero rows = conv1 pad + conv2 halo).
    x_pad = jnp.zeros((B, L_r + 16, Cin), cdt)
    x_pad = x_pad.at[:, 2:2 + L, :].set(x_blc.astype(cdt))
    # Overlapped row tiles: tile t covers padded rows [t*RT, t*RT + RTB).
    row_idx = jnp.arange(nT)[:, None] * RT + jnp.arange(RTB)[None, :]
    x_tiles = jnp.take(x_pad, row_idx, axis=1)   # (B, nT, RTB, Cin)

    # Per-tap weight slabs (K, C_p, Cout_p); biases stay f32.
    def pack_w(w, cin, cin_p):
        wt = jnp.transpose(w, (2, 1, 0))                                  # (K, Cin, Cout)
        wt = jnp.pad(wt, ((0, 0), (0, cin_p - cin), (0, Cout_p - Cout)))
        return wt.astype(cdt)

    w1_t = pack_w(w1, Cin, Cin_p)                # (3, Cin_p, Cout_p)
    w2_t = pack_w(w2, Cout, Cout_p)              # (3, Cout_p, Cout_p)
    b1_m = jnp.pad(b1, (0, Cout_p - Cout)).astype(jnp.float32).reshape(1, Cout_p)
    b2_m = jnp.pad(b2, (0, Cout_p - Cout)).astype(jnp.float32).reshape(1, Cout_p)

    kernel = functools.partial(
        _stem_kernel, L=L, RT=RT, Rh=Rh, Cin=Cin,
        pad_lanes=(Cin != Cin_p), slope=leaky_relu_slope)

    out = pl.pallas_call(
        kernel,
        out_shape=jax.ShapeDtypeStruct((B, L_r, Cout_p), x_blc.dtype),
        grid_spec=pltpu.PrefetchScalarGridSpec(
            num_scalar_prefetch=0,
            grid=(B, nT),
            in_specs=[
                pl.BlockSpec((None, None, RTB, Cin), lambda b, t: (b, t, 0, 0)),
                pl.BlockSpec((3, Cin_p, Cout_p), lambda b, t: (0, 0, 0)),
                pl.BlockSpec((1, Cout_p), lambda b, t: (0, 0)),
                pl.BlockSpec((3, Cout_p, Cout_p), lambda b, t: (0, 0, 0)),
                pl.BlockSpec((1, Cout_p), lambda b, t: (0, 0)),
            ],
            out_specs=pl.BlockSpec((None, RT, Cout_p), lambda b, t: (b, t, 0)),
            scratch_shapes=[
                pltpu.VMEM((RTB, Cin_p), cdt),   # lane-padded input tile
                pltpu.VMEM((Rh, Cout_p), cdt),   # conv1 activation tile
            ],
        ),
        compiler_params=pltpu.CompilerParams(
            # both axes write disjoint output tiles -> shard across TCs on v7x
            dimension_semantics=("parallel", "parallel"),
        ),
    )(x_tiles, w1_t, b1_m, w2_t, b2_m)

    if not unpad:
        return out                               # keep padded layout for the consumer
    return out[:, :L, :Cout]


# ----------------------------- pure-JAX reference ------------------------------

def stem_reference(x_blc, params, *, leaky_relu_slope=0.2):
    x = jnp.transpose(x_blc, (0, 2, 1))          # (B, Cin, L), like x.transpose(1, 2)

    def conv(z, w, b):
        y = lax.conv_general_dilated(
            z, w, window_strides=(1,), padding=[(1, 1)],
            dimension_numbers=("NCH", "OIH", "NCH"))
        return y + b.reshape(1, -1, 1)

    h = conv(x, params["w1"], params["b1"])
    h = jnp.where(h > 0, h, leaky_relu_slope * h)        # LeakyReLU(0.2)
    y = conv(h, params["w2"], params["b2"])
    return jnp.transpose(y, (0, 2, 1))


# ----------------------------- main -------------------------------------------

if __name__ == "__main__":
    B, L, C_IN, C_OUT = 2, 16, 4, 8

    key = jax.random.PRNGKey(0)
    kx, k1, k2, k3, k4 = jax.random.split(key, 5)
    x = jax.random.normal(kx, (B, L, C_IN), jnp.float32)   # Stem input is (B, L, C)

    params = {
        "w1": 0.3 * jax.random.normal(k1, (C_OUT, C_IN, 3), jnp.float32),
        "b1": 0.1 * jax.random.normal(k2, (C_OUT,), jnp.float32),
        "w2": 0.3 * jax.random.normal(k3, (C_OUT, C_OUT, 3), jnp.float32),
        "b2": 0.1 * jax.random.normal(k4, (C_OUT,), jnp.float32),
    }

    y_ref = jax.block_until_ready(stem_reference(x, params))

    # 1) single row tile (whole sequence per grid step)
    y = jax.block_until_ready(stem_forward(x, params))
    np.testing.assert_allclose(np.asarray(y), np.asarray(y_ref), rtol=1e-5, atol=1e-5)

    # 2) multi-tile path (two 8-row tiles) -> exercises the halo handling
    y_t = jax.block_until_ready(stem_forward(x, params, row_tile=8))
    np.testing.assert_allclose(np.asarray(y_t), np.asarray(y_ref), rtol=1e-5, atol=1e-5)

    # 3) bf16 compute path (recommended on v6e/v7x); bias/accumulation stay f32
    y_bf = jax.block_until_ready(
        stem_forward(x, params, row_tile=8, compute_dtype=jnp.bfloat16))
    np.testing.assert_allclose(np.asarray(y_bf), np.asarray(y_ref), rtol=5e-2, atol=1e-1)

    assert y.shape == (B, L, C_OUT)
    print("KERNEL_OK")
</pallas_src>

<mosaic_0001>
module attributes {stable_mosaic.version = 11 : i64} {
  func.func @_stem_kernel(%arg0: i32, %arg1: i32, %arg2: memref<1x1x32x4xf32, #tpu.memory_space<vmem>>, %arg3: memref<3x128x128xf32, #tpu.memory_space<vmem>>, %arg4: memref<1x128xf32, #tpu.memory_space<vmem>>, %arg5: memref<3x128x128xf32, #tpu.memory_space<vmem>>, %arg6: memref<1x128xf32, #tpu.memory_space<vmem>>, %arg7: memref<1x16x128xf32, #tpu.memory_space<vmem>>, %arg8: memref<32x128xf32, #tpu.memory_space<vmem>>, %arg9: memref<24x128xf32, #tpu.memory_space<vmem>>) attributes {dimension_semantics = [#tpu.dimension_semantics<parallel>, #tpu.dimension_semantics<parallel>], iteration_bounds = array<i64: 2, 1>, scalar_prefetch = 0 : i64, scratch_operands = 2 : i64, tpu.core_type = #tpu.core_type<tc>, window_params = [{transform_indices = @transform_0, window_bounds = array<i64: 1, 1, 32, 4>}, {pipeline_mode = #tpu.pipeline_mode<synchronous>, transform_indices = @transform_1, window_bounds = array<i64: 3, 128, 128>}, {pipeline_mode = #tpu.pipeline_mode<synchronous>, transform_indices = @transform_2, window_bounds = array<i64: 1, 128>}, {pipeline_mode = #tpu.pipeline_mode<synchronous>, transform_indices = @transform_3, window_bounds = array<i64: 3, 128, 128>}, {pipeline_mode = #tpu.pipeline_mode<synchronous>, transform_indices = @transform_4, window_bounds = array<i64: 1, 128>}, {transform_indices = @transform_5, window_bounds = array<i64: 1, 16, 128>}]} {
    %cst = arith.constant 0.000000e+00 : f32
    %0 = vector.broadcast %cst : f32 to vector<32x128xf32>
    %c0 = arith.constant 0 : index
    %c0_0 = arith.constant 0 : index
    %1 = vector.load %arg8[%c0, %c0_0] : memref<32x128xf32, #tpu.memory_space<vmem>>, vector<32x128xf32>
    tpu.vector_store %arg8[%c0, %c0_0], %0 {strides = array<i32>} : memref<32x128xf32, #tpu.memory_space<vmem>>, vector<32x128xf32>,
    %c0_1 = arith.constant 0 : index
    %c0_2 = arith.constant 0 : index
    %c0_3 = arith.constant 0 : index
    %c0_4 = arith.constant 0 : index
    %2 = vector.load %arg2[%c0_1, %c0_2, %c0_3, %c0_4] : memref<1x1x32x4xf32, #tpu.memory_space<vmem>>, vector<1x1x32x4xf32>
    %3 = vector.shape_cast %2 : vector<1x1x32x4xf32> to vector<32x4xf32>
    %c0_5 = arith.constant 0 : index
    %c0_6 = arith.constant 0 : index
    %4 = vector.load %arg8[%c0_5, %c0_6] : memref<32x128xf32, #tpu.memory_space<vmem>>, vector<32x4xf32>
    tpu.vector_store %arg8[%c0_5, %c0_6], %3 {strides = array<i32>} : memref<32x128xf32, #tpu.memory_space<vmem>>, vector<32x4xf32>,
    %c0_7 = arith.constant 0 : index
    %c0_8 = arith.constant 0 : index
    %5 = vector.load %arg8[%c0_7, %c0_8] : memref<32x128xf32, #tpu.memory_space<vmem>>, vector<24x128xf32>
    %c0_9 = arith.constant 0 : index
    %c0_10 = arith.constant 0 : index
    %c0_11 = arith.constant 0 : index
    %6 = vector.load %arg3[%c0_9, %c0_10, %c0_11] : memref<3x128x128xf32, #tpu.memory_space<vmem>>, vector<1x128x128xf32>
    %7 = vector.shape_cast %6 : vector<1x128x128xf32> to vector<128x128xf32>
    %cst_12 = arith.constant dense<0.000000e+00> : vector<24x128xf32>
    %8 = tpu.matmul %5, %7, %cst_12 {dimension_numbers = #tpu.dot_dimension_numbers<[1], [0], [0], [1], [0, 0, 1, 1], [], []>} : vector<24x128xf32>, vector<128x128xf32>, vector<24x128xf32> -> vector<24x128xf32>
    %c1 = arith.constant 1 : index
    %c0_13 = arith.constant 0 : index
    %9 = vector.load %arg8[%c1, %c0_13] : memref<32x128xf32, #tpu.memory_space<vmem>>, vector<24x128xf32>
    %c1_14 = arith.constant 1 : index
    %c0_15 = arith.constant 0 : index
    %c0_16 = arith.constant 0 : index
    %10 = vector.load %arg3[%c1_14, %c0_15, %c0_16] : memref<3x128x128xf32, #tpu.memory_space<vmem>>, vector<1x128x128xf32>
    %11 = vector.shape_cast %10 : vector<1x128x128xf32> to vector<128x128xf32>
    %cst_17 = arith.constant dense<0.000000e+00> : vector<24x128xf32>
    %12 = tpu.matmul %9, %11, %cst_17 {dimension_numbers = #tpu.dot_dimension_numbers<[1], [0], [0], [1], [0, 0, 1, 1], [], []>} : vector<24x128xf32>, vector<128x128xf32>, vector<24x128xf32> -> vector<24x128xf32>
    %13 = arith.addf %8, %12 : vector<24x128xf32>
    %c2 = arith.constant 2 : index
    %c0_18 = arith.constant 0 : index
    %14 = vector.load %arg8[%c2, %c0_18] : memref<32x128xf32, #tpu.memory_space<vmem>>, vector<24x128xf32>
    %c2_19 = arith.constant 2 : index
    %c0_20 = arith.constant 0 : index
    %c0_21 = arith.constant 0 : index
    %15 = vector.load %arg3[%c2_19, %c0_20, %c0_21] : memref<3x128x128xf32, #tpu.memory_space<vmem>>, vector<1x128x128xf32>
    %16 = vector.shape_cast %15 : vector<1x128x128xf32> to vector<128x128xf32>
    %cst_22 = arith.constant dense<0.000000e+00> : vector<24x128xf32>
    %17 = tpu.matmul %14, %16, %cst_22 {dimension_numbers = #tpu.dot_dimension_numbers<[1], [0], [0], [1], [0, 0, 1, 1], [], []>} : vector<24x128xf32>, vector<128x128xf32>, vector<24x128xf32> -> vector<24x128xf32>
    %18 = arith.addf %13, %17 : vector<24x128xf32>
    %c0_23 = arith.constant 0 : index
    %c0_24 = arith.constant 0 : index
    %19 = vector.load %arg4[%c0_23, %c0_24] : memref<1x128xf32, #tpu.memory_space<vmem>>, vector<1x128xf32>
    %20 = vector.broadcast %19 : vector<1x128xf32> to vector<24x128xf32>
    %21 = arith.addf %18, %20 : vector<24x128xf32>
    %cst_25 = arith.constant 0.000000e+00 : f32
    %22 = vector.broadcast %cst_25 : f32 to vector<24x128xf32>
    %23 = arith.cmpf ogt, %21, %22 : vector<24x128xf32>
    %cst_26 = arith.constant 2.000000e-01 : f32
    %24 = vector.broadcast %cst_26 : f32 to vector<24x128xf32>
    %25 = arith.mulf %24, %21 : vector<24x128xf32>
    %26 = arith.select %23, %21, %25 : vector<24x128xi1>, vector<24x128xf32>
    %27 = tpu.iota {dimensions = array<i32: 0>} : vector<24x1xi32>
    %c16_i32 = arith.constant 16 : i32
    %28 = arith.muli %arg1, %c16_i32 : i32
    %c1_i32 = arith.constant 1 : i32
    %29 = arith.subi %28, %c1_i32 : i32
    %30 = vector.broadcast %29 : i32 to vector<24x1xi32>
    %31 = arith.addi %30, %27 : vector<24x1xi32>
    %c0_i32 = arith.constant 0 : i32
    %32 = vector.broadcast %c0_i32 : i32 to vector<24x1xi32>
    %33 = arith.cmpi sge, %31, %32 : vector<24x1xi32>
    %c16_i32_27 = arith.constant 16 : i32
    %34 = vector.broadcast %c16_i32_27 : i32 to vector<24x1xi32>
    %35 = arith.cmpi slt, %31, %34 : vector<24x1xi32>
    %36 = arith.andi %33, %35 : vector<24x1xi1>
    %cst_28 = arith.constant 0.000000e+00 : f32
    %37 = vector.shape_cast %36 : vector<24x1xi1> to vector<24x1xi1>
    %38 = vector.broadcast %37 : vector<24x1xi1> to vector<24x128xi1>
    %39 = vector.broadcast %cst_28 : f32 to vector<24x128xf32>
    %40 = arith.select %38, %26, %39 : vector<24x128xi1>, vector<24x128xf32>
    %c0_29 = arith.constant 0 : index
    %c0_30 = arith.constant 0 : index
    %41 = vector.load %arg9[%c0_29, %c0_30] : memref<24x128xf32, #tpu.memory_space<vmem>>, vector<24x128xf32>
    tpu.vector_store %arg9[%c0_29, %c0_30], %40 {strides = array<i32>} : memref<24x128xf32, #tpu.memory_space<vmem>>, vector<24x128xf32>,
    %c0_31 = arith.constant 0 : index
    %c0_32 = arith.constant 0 : index
    %42 = vector.load %arg9[%c0_31, %c0_32] : memref<24x128xf32, #tpu.memory_space<vmem>>, vector<16x128xf32>
    %c0_33 = arith.constant 0 : index
    %c0_34 = arith.constant 0 : index
    %c0_35 = arith.constant 0 : index
    %43 = vector.load %arg5[%c0_33, %c0_34, %c0_35] : memref<3x128x128xf32, #tpu.memory_space<vmem>>, vector<1x128x128xf32>
    %44 = vector.shape_cast %43 : vector<1x128x128xf32> to vector<128x128xf32>
    %cst_36 = arith.constant dense<0.000000e+00> : vector<16x128xf32>
    %45 = tpu.matmul %42, %44, %cst_36 {dimension_numbers = #tpu.dot_dimension_numbers<[1], [0], [0], [1], [0, 0, 1, 1], [], []>} : vector<16x128xf32>, vector<128x128xf32>, vector<16x128xf32> -> vector<16x128xf32>
    %c1_37 = arith.constant 1 : index
    %c0_38 = arith.constant 0 : index
    %46 = vector.load %arg9[%c1_37, %c0_38] : memref<24x128xf32, #tpu.memory_space<vmem>>, vector<16x128xf32>
    %c1_39 = arith.constant 1 : index
    %c0_40 = arith.constant 0 : index
    %c0_41 = arith.constant 0 : index
    %47 = vector.load %arg5[%c1_39, %c0_40, %c0_41] : memref<3x128x128xf32, #tpu.memory_space<vmem>>, vector<1x128x128xf32>
    %48 = vector.shape_cast %47 : vector<1x128x128xf32> to vector<128x128xf32>
    %cst_42 = arith.constant dense<0.000000e+00> : vector<16x128xf32>
    %49 = tpu.matmul %46, %48, %cst_42 {dimension_numbers = #tpu.dot_dimension_numbers<[1], [0], [0], [1], [0, 0, 1, 1], [], []>} : vector<16x128xf32>, vector<128x128xf32>, vector<16x128xf32> -> vector<16x128xf32>
    %50 = arith.addf %45, %49 : vector<16x128xf32>
    %c2_43 = arith.constant 2 : index
    %c0_44 = arith.constant 0 : index
    %51 = vector.load %arg9[%c2_43, %c0_44] : memref<24x128xf32, #tpu.memory_space<vmem>>, vector<16x128xf32>
    %c2_45 = arith.constant 2 : index
    %c0_46 = arith.constant 0 : index
    %c0_47 = arith.constant 0 : index
    %52 = vector.load %arg5[%c2_45, %c0_46, %c0_47] : memref<3x128x128xf32, #tpu.memory_space<vmem>>, vector<1x128x128xf32>
    %53 = vector.shape_cast %52 : vector<1x128x128xf32> to vector<128x128xf32>
    %cst_48 = arith.constant dense<0.000000e+00> : vector<16x128xf32>
    %54 = tpu.matmul %51, %53, %cst_48 {dimension_numbers = #tpu.dot_dimension_numbers<[1], [0], [0], [1], [0, 0, 1, 1], [], []>} : vector<16x128xf32>, vector<128x128xf32>, vector<16x128xf32> -> vector<16x128xf32>
    %55 = arith.addf %50, %54 : vector<16x128xf32>
    %c0_49 = arith.constant 0 : index
    %c0_50 = arith.constant 0 : index
    %56 = vector.load %arg6[%c0_49, %c0_50] : memref<1x128xf32, #tpu.memory_space<vmem>>, vector<1x128xf32>
    %57 = vector.broadcast %56 : vector<1x128xf32> to vector<16x128xf32>
    %58 = arith.addf %55, %57 : vector<16x128xf32>
    %c0_51 = arith.constant 0 : index
    %c0_52 = arith.constant 0 : index
    %c0_53 = arith.constant 0 : index
    %59 = vector.load %arg7[%c0_51, %c0_52, %c0_53] : memref<1x16x128xf32, #tpu.memory_space<vmem>>, vector<1x16x128xf32>
    %60 = vector.shape_cast %59 : vector<1x16x128xf32> to vector<16x128xf32>
    %61 = vector.shape_cast %58 : vector<16x128xf32> to vector<1x16x128xf32>
    tpu.vector_store %arg7[%c0_51, %c0_52, %c0_53], %61 {strides = array<i32>} : memref<1x16x128xf32, #tpu.memory_space<vmem>>, vector<1x16x128xf32>,
    return
  }
  func.func @transform_0(%arg0: i32, %arg1: i32) -> (i32, i32, i32, i32) {
    %c0_i32 = arith.constant 0 : i32
    %c0_i32_0 = arith.constant 0 : i32
    %c0_i32_1 = arith.constant 0 : i32
    return %arg0, %arg1, %c0_i32, %c0_i32_0 : i32, i32, i32, i32
  }
  func.func @transform_1(%arg0: i32, %arg1: i32) -> (i32, i32, i32) {
    %c0_i32 = arith.constant 0 : i32
    %c0_i32_0 = arith.constant 0 : i32
    %c0_i32_1 = arith.constant 0 : i32
    %c0_i32_2 = arith.constant 0 : i32
    return %c0_i32, %c0_i32_0, %c0_i32_1 : i32, i32, i32
  }
  func.func @transform_2(%arg0: i32, %arg1: i32) -> (i32, i32) {
    %c0_i32 = arith.constant 0 : i32
    %c0_i32_0 = arith.constant 0 : i32
    %c0_i32_1 = arith.constant 0 : i32
    return %c0_i32, %c0_i32_0 : i32, i32
  }
  func.func @transform_3(%arg0: i32, %arg1: i32) -> (i32, i32, i32) {
    %c0_i32 = arith.constant 0 : i32
    %c0_i32_0 = arith.constant 0 : i32
    %c0_i32_1 = arith.constant 0 : i32
    %c0_i32_2 = arith.constant 0 : i32
    return %c0_i32, %c0_i32_0, %c0_i32_1 : i32, i32, i32
  }
  func.func @transform_4(%arg0: i32, %arg1: i32) -> (i32, i32) {
    %c0_i32 = arith.constant 0 : i32
    %c0_i32_0 = arith.constant 0 : i32
    %c0_i32_1 = arith.constant 0 : i32
    return %c0_i32, %c0_i32_0 : i32, i32
  }
  func.func @transform_5(%arg0: i32, %arg1: i32) -> (i32, i32, i32) {
    %c0_i32 = arith.constant 0 : i32
    %c0_i32_0 = arith.constant 0 : i32
    return %arg0, %arg1, %c0_i32 : i32, i32, i32
  }
}

</mosaic_0001>

<llo_original>
// kernel: tpu_custom_call.1
$region0: #{tpu_custom_call.1}
  #allocation0 [shape = 'u32[]', space=smem, size = 0x4, offset = 0x4, fixed_abs, tag = 'smem constant byte address 0x4 - core index']
  #allocation1 [shape = 'u32[144,128]{1,0:T(1,128)}', space=vmem, size = 0x12000, scoped, tag = 'internal scratch']
  #allocation2 [shape = 'f32[32,128]{1,0:T(8,128)}', space=vmem, size = 0x4000, scoped, tag = 'scratch operand']
  #allocation3 [shape = 'f32[24,128]{1,0:T(8,128)}', space=vmem, size = 0x3000, scoped, tag = 'scratch operand']
  %s0 = inlined_call_operand.vmem [shape: f32[2,1,32,4], index: 0, kind: input, shape index: {}]
  %s1 = inlined_call_operand.hbm [shape: f32[3,128,128], index: 1, kind: input, shape index: {}]
  %s2 = inlined_call_operand.vmem [shape: f32[1,128], index: 2, kind: input, shape index: {}]
  %s3 = inlined_call_operand.hbm [shape: f32[3,128,128], index: 3, kind: input, shape index: {}]
  %s4 = inlined_call_operand.vmem [shape: f32[1,128], index: 4, kind: input, shape index: {}]
  %s5 = inlined_call_operand.hbm [shape: f32[2,16,128], index: 5, kind: output, shape index: {}]
  %s6 = sld [smem:[#allocation0]]
  $region61: #{tpu_custom_call.1} parent=0
    _
  %s8 = ssub.s32 1, %s6
  %s9 = scalar_select 0, %s8, %s6
  $region1: #{tpu_custom_call.1} parent=0
    #allocation4 [shape = 'u8[196608]{0}', space=vmem, size = 0x30000, scoped, tag = 'input window, operand 1, single buffered']
    #allocation5 [shape = 's32[2]{0}', space=sflag, size = 0x8, scoped, tag = 'scoped memory for tpu_custom_call.1']
    #allocation6 [shape = 's32[2]{0}', space=sflag, size = 0x8, scoped, tag = 'scoped memory for tpu_custom_call.1']
    #allocation7 [shape = 'u8[196608]{0}', space=vmem, size = 0x30000, scoped, tag = 'input window, operand 3, single buffered']
    #allocation8 [shape = 's32[1]{0}', space=sflag, size = 0x4, scoped, tag = 'scoped memory for tpu_custom_call.1']
    #allocation9 [shape = 'u8[16384]{0}', space=vmem, size = 0x4000, scoped, tag = 'output window, operand 0']
    %10 = vsyncpa [#allocation5], 0
    %11 = vsyncpa [#allocation8], 0
    %12 = vsyncpa [#allocation6], 0
    %s13 = scalar_lea.sflag [#allocation6], 1
    %14 = vsyncpa %s13, 0
    loop: start=0, step=1, limit=4
    $region2: #{tpu_custom_call.1} parent=1 // loop_pre_header
      _
    $region3: #{tpu_custom_call.1} parent=1 // loop_header
      %s16 = sphi 0, %s20
      %p17 = scmp.ge.s32.totalorder %s16, 4
      %s23 = sphi 0, %s35
      %s24 = sphi 0, %s31
      %s25 = sphi 0, %s23
      %s26 = sphi 0, %s24
      %s27 = sphi 0, %s25
      %s28 = sphi 0, %s26
      %s40 = sphi 0, %s42
      %s43 = sphi 0, %s40
      %s44 = sphi 0, %s43
      %s60 = sphi 0, %s44
      %s64 = sphi 0, %s64
      %s66 = sphi 0, %s64
      %s67 = sphi 0, %s66
      %s81 = sphi 0, %s67
      %s85 = sphi 0, %s85
      %s87 = sphi 0, %s85
      %s88 = sphi 0, %s87
      %s102 = sphi 0, %s88
      %s106 = sphi 0, %s106
      %s108 = sphi 0, %s106
      %s109 = sphi 0, %s108
      %s123 = sphi 0, %s109
      %s127 = sphi 0, %s127
      %s129 = sphi 0, %s127
      %s130 = sphi 0, %s129
      %s144 = sphi 0, %s130
      %s152 = sphi 0, %s154
      %s155 = sphi 0, %s152
      %s156 = sphi 0, %s155
      %s172 = sphi 0, %s156
    $region4: #{tpu_custom_call.1} parent=1 // loop_header_branch
      %19 = sbr.rel (%p17) target = $region8
    $region5: #{tpu_custom_call.1} parent=1 // loop_body
      %s21 = ssub.s32 %s16, 1
      %s22 = ssub.s32 %s16, 2
      %s29 = sadd.s32 1, %s24
      %p30 = scmp.ge.s32.totalorder %s29, 1
      %s31 = scalar_select %p30, 0, %s29
      %s32 = sadd.s32 1, %s23
      %s33 = scalar_select %p30, %s32, %s23
      %p34 = scmp.ge.s32.totalorder %s33, 2
      %s35 = scalar_select %p34, 0, %s33
      %s36 = ssub.s32 %s23, %s35
      %s37 = ssub.s32 %s24, %s31
      %s38 = sor.u32 %s36, %s37
      %p39 = scmp.eq.s32.totalorder %s38, 0
      %s41 = sadd.s32 %s40, 1
      %s42 = scalar_select %p39, %s40, %s41
      %p45 = pneg %p39
      %p46 = scmp.eq.s32.totalorder %s16, 1
      %p47 = por %p45, %p46
      %p48 = scmp.ne.s32.totalorder %s40, %s43
      %p49 = scmp.eq.s32.totalorder %s16, 0
      %p50 = por %p48, %p49
      %p51 = scmp.ne.s32.totalorder %s40, %s43
      %p52 = scmp.eq.s32.totalorder %s21, 1
      %p53 = por %p51, %p52
      %p54 = scmp.ne.s32.totalorder %s43, %s44
      %p55 = scmp.eq.s32.totalorder %s21, 0
      %p56 = por %p54, %p55
      %p57 = scmp.ne.s32.totalorder %s43, %s44
      %p58 = scmp.eq.s32.totalorder %s22, 1
      %p59 = por %p57, %p58
      %p61 = scmp.ne.s32.totalorder %s44, %s60
      %p62 = scmp.eq.s32.totalorder %s22, 0
      %p63 = por %p61, %p62
      %s65 = sadd.s32 %s64, 1
      %p68 = scmp.eq.s32.totalorder %s16, 1
      %p69 = scmp.ne.s32.totalorder %s64, %s66
      %p70 = scmp.eq.s32.totalorder %s16, 0
      %p71 = por %p69, %p70
      %p72 = scmp.ne.s32.totalorder %s64, %s66
      %p73 = scmp.eq.s32.totalorder %s21, 1
      %p74 = por %p72, %p73
      %p75 = scmp.ne.s32.totalorder %s66, %s67
      %p76 = scmp.eq.s32.totalorder %s21, 0
      %p77 = por %p75, %p76
      %p78 = scmp.ne.s32.totalorder %s66, %s67
      %p79 = scmp.eq.s32.totalorder %s22, 1
      %p80 = por %p78, %p79
      %p82 = scmp.ne.s32.totalorder %s67, %s81
      %p83 = scmp.eq.s32.totalorder %s22, 0
      %p84 = por %p82, %p83
      %s86 = sadd.s32 %s85, 1
      %p89 = scmp.eq.s32.totalorder %s16, 1
      %p90 = scmp.ne.s32.totalorder %s85, %s87
      %p91 = scmp.eq.s32.totalorder %s16, 0
      %p92 = por %p90, %p91
      %p93 = scmp.ne.s32.totalorder %s85, %s87
      %p94 = scmp.eq.s32.totalorder %s21, 1
      %p95 = por %p93, %p94
      %p96 = scmp.ne.s32.totalorder %s87, %s88
      %p97 = scmp.eq.s32.totalorder %s21, 0
      %p98 = por %p96, %p97
      %p99 = scmp.ne.s32.totalorder %s87, %s88
      %p100 = scmp.eq.s32.totalorder %s22, 1
      %p101 = por %p99, %p100
      %p103 = scmp.ne.s32.totalorder %s88, %s102
      %p104 = scmp.eq.s32.totalorder %s22, 0
      %p105 = por %p103, %p104
      %s107 = sadd.s32 %s106, 1
      %p110 = scmp.eq.s32.totalorder %s16, 1
      %p111 = scmp.ne.s32.totalorder %s106, %s108
      %p112 = scmp.eq.s32.totalorder %s16, 0
      %p113 = por %p111, %p112
      %p114 = scmp.ne.s32.totalorder %s106, %s108
      %p115 = scmp.eq.s32.totalorder %s21, 1
      %p116 = por %p114, %p115
      %p117 = scmp.ne.s32.totalorder %s108, %s109
      %p118 = scmp.eq.s32.totalorder %s21, 0
      %p119 = por %p117, %p118
      %p120 = scmp.ne.s32.totalorder %s108, %s109
      %p121 = scmp.eq.s32.totalorder %s22, 1
      %p122 = por %p120, %p121
      %p124 = scmp.ne.s32.totalorder %s109, %s123
      %p125 = scmp.eq.s32.totalorder %s22, 0
      %p126 = por %p124, %p125
      %s128 = sadd.s32 %s127, 1
      %p131 = scmp.eq.s32.totalorder %s16, 1
      %p132 = scmp.ne.s32.totalorder %s127, %s129
      %p133 = scmp.eq.s32.totalorder %s16, 0
      %p134 = por %p132, %p133
      %p135 = scmp.ne.s32.totalorder %s127, %s129
      %p136 = scmp.eq.s32.totalorder %s21, 1
      %p137 = por %p135, %p136
      %p138 = scmp.ne.s32.totalorder %s129, %s130
      %p139 = scmp.eq.s32.totalorder %s21, 0
      %p140 = por %p138, %p139
      %p141 = scmp.ne.s32.totalorder %s129, %s130
      %p142 = scmp.eq.s32.totalorder %s22, 1
      %p143 = por %p141, %p142
      %p145 = scmp.ne.s32.totalorder %s130, %s144
      %p146 = scmp.eq.s32.totalorder %s22, 0
      %p147 = por %p145, %p146
      %s148 = ssub.s32 %s23, %s35
      %s149 = ssub.s32 %s24, %s31
      %s150 = sor.u32 %s148, %s149
      %p151 = scmp.eq.s32.totalorder %s150, 0
      %s153 = sadd.s32 %s152, 1
      %s154 = scalar_select %p151, %s152, %s153
      %p157 = pneg %p151
      %p158 = scmp.eq.s32.totalorder %s16, 1
      %p159 = por %p157, %p158
      %p160 = scmp.ne.s32.totalorder %s152, %s155
      %p161 = scmp.eq.s32.totalorder %s16, 0
      %p162 = por %p160, %p161
      %p163 = scmp.ne.s32.totalorder %s152, %s155
      %p164 = scmp.eq.s32.totalorder %s21, 1
      %p165 = por %p163, %p164
      %p166 = scmp.ne.s32.totalorder %s155, %s156
      %p167 = scmp.eq.s32.totalorder %s21, 0
      %p168 = por %p166, %p167
      %p169 = scmp.ne.s32.totalorder %s155, %s156
      %p170 = scmp.eq.s32.totalorder %s22, 1
      %p171 = por %p169, %p170
      %p173 = scmp.ne.s32.totalorder %s156, %s172
      %p174 = scmp.eq.s32.totalorder %s22, 0
      %p175 = por %p173, %p174
      %p176 = scmp.le.s32.totalorder 1, %s16
      %p177 = scmp.lt.s32.totalorder %s16, 3
      %p178 = pnand %p176, %p177
      %p179 = pneg %p178
      // Predicated region
      $region9: #{tpu_custom_call.1} parent=5 // pred_check
        _
      $region10: #{tpu_custom_call.1} parent=5 // pred_check_branch
        %181 = sbr.rel (%p178) target = $region12
      $region11: #{tpu_custom_call.1} parent=5 // pred_region
        %s182 = ssub.s32 %s16, 1
        // Predicated region
        $region13: #{tpu_custom_call.1} parent=11 // pred_check
          %p183 = pneg %p77
        $region14: #{tpu_custom_call.1} parent=11 // pred_check_branch
          %185 = sbr.rel (%p183) target = $region16
        $region15: #{tpu_custom_call.1} parent=11 // pred_region
          %s187 = ssub.s32 6144, 6144
          %188 = vsyncadd [#allocation5], %s187
          %s189 = sshll.u32 [#allocation4], 4
          %s190 = int_to_ptr.vmem [resolvable:$true] %s189
          %195 = dma.hbm_to_vmem [thread:$0]  %s1, 6144, %s190, [#allocation5], 128, 128, 8
        $region16: #{tpu_custom_call.1} parent=11 // pred_fallthru
          _
        // Predicated region
        $region17: #{tpu_custom_call.1} parent=11 // pred_check
          %p196 = pneg %p98
        $region18: #{tpu_custom_call.1} parent=11 // pred_check_branch
          %198 = sbr.rel (%p196) target = $region20
        $region19: #{tpu_custom_call.1} parent=11 // pred_region
          _
        $region20: #{tpu_custom_call.1} parent=11 // pred_fallthru
          _
        // Predicated region
        $region21: #{tpu_custom_call.1} parent=11 // pred_check
          %p199 = pneg %p119
        $region22: #{tpu_custom_call.1} parent=11 // pred_check_branch
          %201 = sbr.rel (%p199) target = $region24
        $region23: #{tpu_custom_call.1} parent=11 // pred_region
          %s203 = ssub.s32 6144, 6144
          %204 = vsyncadd [#allocation8], %s203
          %s205 = sshll.u32 [#allocation7], 4
          %s206 = int_to_ptr.vmem [resolvable:$true] %s205
          %211 = dma.hbm_to_vmem [thread:$0]  %s3, 6144, %s206, [#allocation8], 128, 128, 8
        $region24: #{tpu_custom_call.1} parent=11 // pred_fallthru
          _
        // Predicated region
        $region25: #{tpu_custom_call.1} parent=11 // pred_check
          %p212 = pneg %p140
        $region26: #{tpu_custom_call.1} parent=11 // pred_check_branch
          %214 = sbr.rel (%p212) target = $region28
        $region27: #{tpu_custom_call.1} parent=11 // pred_region
          _
        $region28: #{tpu_custom_call.1} parent=11 // pred_fallthru
          _
      $region12: #{tpu_custom_call.1} parent=5 // pred_fallthru
        _
      %p215 = scmp.lt.s32.totalorder %s16, 2
      // Predicated region
      $region29: #{tpu_custom_call.1} parent=5 // pred_check
        %p216 = pneg %p215
      $region30: #{tpu_custom_call.1} parent=5 // pred_check_branch
        %218 = sbr.rel (%p216) target = $region32
      $region31: #{tpu_custom_call.1} parent=5 // pred_region
        // Predicated region
        $region33: #{tpu_custom_call.1} parent=31 // pred_check
          %p219 = pneg %p50
        $region34: #{tpu_custom_call.1} parent=31 // pred_check_branch
          %221 = sbr.rel (%p219) target = $region36
        $region35: #{tpu_custom_call.1} parent=31 // pred_region
          %p222 = scmp.lt.s32.totalorder %s23, 1
          %s223 = scalar_select %p222, %s23, 1
          %p224 = scmp.lt.s32.totalorder %s24, 0
          %s225 = scalar_select %p224, %s24, 0
          %s226 = smul.addr %s225, 4
          %s227 = smul.addr %s223, 4
          %s228 = sadd.s32 %s226, %s227
          %s229 = smul.addr %s228, 8
          %s230 = scalar_lea.vmem %s0, %s229
        $region36: #{tpu_custom_call.1} parent=31 // pred_fallthru
          _
      $region32: #{tpu_custom_call.1} parent=5 // pred_fallthru
        _
      %p231 = scmp.le.s32.totalorder 1, %s16
      %p232 = scmp.lt.s32.totalorder %s16, 3
      %p233 = pnand %p231, %p232
      %p234 = pneg %p233
      // Predicated region
      $region37: #{tpu_custom_call.1} parent=5 // pred_check
        _
      $region38: #{tpu_custom_call.1} parent=5 // pred_check_branch
        %236 = sbr.rel (%p233) target = $region40
      $region39: #{tpu_custom_call.1} parent=5 // pred_region
        %s237 = ssub.s32 %s16, 1
        // Predicated region
        $region41: #{tpu_custom_call.1} parent=39 // pred_check
          %p238 = pneg %p77
        $region42: #{tpu_custom_call.1} parent=39 // pred_check_branch
          %240 = sbr.rel (%p238) target = $region44
        $region43: #{tpu_custom_call.1} parent=39 // pred_region
          %241 = dma.done [#allocation5], 6144
        $region44: #{tpu_custom_call.1} parent=39 // pred_fallthru
          _
        // Predicated region
        $region45: #{tpu_custom_call.1} parent=39 // pred_check
          %p242 = pneg %p119
        $region46: #{tpu_custom_call.1} parent=39 // pred_check_branch
          %244 = sbr.rel (%p242) target = $region48
        $region47: #{tpu_custom_call.1} parent=39 // pred_region
          %245 = dma.done [#allocation8], 6144
        $region48: #{tpu_custom_call.1} parent=39 // pred_fallthru
          _
        %p246 = scmp.lt.s32.totalorder %s25, 1
        %s247 = scalar_select %p246, %s25, 1
        %p248 = scmp.lt.s32.totalorder %s26, 0
        %s249 = scalar_select %p248, %s26, 0
        %s250 = smul.addr %s249, 4
        %s251 = smul.addr %s247, 4
        %s252 = sadd.s32 %s250, %s251
        %s253 = smul.addr %s252, 8
        %s254 = scalar_lea.vmem %s0, %s253
        %p255 = pneg %p56
        %p256 = pneg %p53
        %p257 = pneg %p77
        %p258 = pneg %p74
        %p259 = pneg %p98
        %p260 = pneg %p95
        %p261 = pneg %p119
        %p262 = pneg %p116
        %p263 = pneg %p140
        %p264 = pneg %p137
        %p265 = pneg %p168
        %p266 = pneg %p165
        %s267 = sand.u32 %s155, 1
        %s268 = scalar_lea.sflag [#allocation6], %s267
        %s269 = sand.u32 %s155, 1
        %s270 = smul.addr %s269, 16
        %s271 = scalar_lea.vmem [#allocation9], %s270
        %p272 = scmp.lt.s32.totalorder %s25, 1
        %s273 = scalar_select %p272, %s25, 1
        %p274 = scmp.lt.s32.totalorder %s26, 0
        %s275 = scalar_select %p274, %s26, 0
        %s276 = smul.addr %s275, 4
        %s277 = smul.addr %s273, 4
        %s278 = sadd.s32 %s276, %s277
        %s279 = smul.addr %s278, 8
        %s280 = scalar_lea.vmem %s0, %s279
        %s281 = smul.u32 2, %s26
        %282 = vst [vmem:[#allocation2] sm:$0xff] 0.0
        %283 = vst [vmem:[#allocation2 + $0x8] sm:$0xff] 0.0
        %284 = vst [vmem:[#allocation2 + $0x10] sm:$0xff] 0.0
        %285 = vst [vmem:[#allocation2 + $0x18] sm:$0xff] 0.0
        %v286 = vld [vmem:[%s280] sm:$0xff]
        %v287 = vld [vmem:[%s280 + $0x8] sm:$0xff]
        %v288 = vld [vmem:[%s280 + $0x10] sm:$0xff]
        %v289 = vld [vmem:[%s280 + $0x18] sm:$0xff]
        %vm290 = vcmask 31744
        %291 = vst.msk [vmem:[#allocation2] sm:$0xff] %vm290, %v286
        %292 = vst.msk [vmem:[#allocation2 + $0x8] sm:$0xff] %vm290, %v287
        %293 = vst.msk [vmem:[#allocation2 + $0x10] sm:$0xff] %vm290, %v288
        %294 = vst.msk [vmem:[#allocation2 + $0x18] sm:$0xff] %vm290, %v289
        %v295 = vld [vmem:[#allocation2] sm:$0xff]
        %v296 = vld [vmem:[#allocation2 + $0x8] sm:$0xff]
        %v297 = vld [vmem:[#allocation2 + $0x10] sm:$0xff]
        %v298 = vld [vmem:[#allocation4] sm:$0xff]
        %v299 = vld [vmem:[#allocation4 + $0x8] sm:$0xff]
        %v300 = vld [vmem:[#allocation4 + $0x10] sm:$0xff]
        %v301 = vld [vmem:[#allocation4 + $0x18] sm:$0xff]
        %v302 = vld [vmem:[#allocation4 + $0x20] sm:$0xff]
        %v303 = vld [vmem:[#allocation4 + $0x28] sm:$0xff]
        %v304 = vld [vmem:[#allocation4 + $0x30] sm:$0xff]
        %v305 = vld [vmem:[#allocation4 + $0x38] sm:$0xff]
        %v306 = vld [vmem:[#allocation4 + $0x40] sm:$0xff]
        %v307 = vld [vmem:[#allocation4 + $0x48] sm:$0xff]
        %v308 = vld [vmem:[#allocation4 + $0x50] sm:$0xff]
        %v309 = vld [vmem:[#allocation4 + $0x58] sm:$0xff]
        %v310 = vld [vmem:[#allocation4 + $0x60] sm:$0xff]
        %v311 = vld [vmem:[#allocation4 + $0x68] sm:$0xff]
        %v312 = vld [vmem:[#allocation4 + $0x70] sm:$0xff]
        %v313 = vld [vmem:[#allocation4 + $0x78] sm:$0xff]
        %v314 = vld [vmem:[#allocation2 + $0x1] sm:$0xff]
        %v315 = vld [vmem:[#allocation2 + $0x9] sm:$0xff]
        %v316 = vld [vmem:[#allocation2 + $0x11] sm:$0xff]
        %s317 = scalar_lea.vmem [#allocation4], 128
        %v318 = vld [vmem:[%s317] sm:$0xff]
        %v319 = vld [vmem:[%s317 + $0x8] sm:$0xff]
        %v320 = vld [vmem:[%s317 + $0x10] sm:$0xff]
        %v321 = vld [vmem:[%s317 + $0x18] sm:$0xff]
        %v322 = vld [vmem:[%s317 + $0x20] sm:$0xff]
        %v323 = vld [vmem:[%s317 + $0x28] sm:$0xff]
        %v324 = vld [vmem:[%s317 + $0x30] sm:$0xff]
        %v325 = vld [vmem:[%s317 + $0x38] sm:$0xff]
        %v326 = vld [vmem:[%s317 + $0x40] sm:$0xff]
        %v327 = vld [vmem:[%s317 + $0x48] sm:$0xff]
        %v328 = vld [vmem:[%s317 + $0x50] sm:$0xff]
        %v329 = vld [vmem:[%s317 + $0x58] sm:$0xff]
        %v330 = vld [vmem:[%s317 + $0x60] sm:$0xff]
        %v331 = vld [vmem:[%s317 + $0x68] sm:$0xff]
        %v332 = vld [vmem:[%s317 + $0x70] sm:$0xff]
        %v333 = vld [vmem:[%s317 + $0x78] sm:$0xff]
        %334 = vmatprep.subr.mxu0 0.0
        %335 = vmatpush1.msra.mxu0 %v318
        %336 = vmatprep.subr.mxu0 0.0
        %337 = vmatpush1.msra.mxu0 %v319
        %338 = vmatprep.subr.mxu0 0.0
        %339 = vmatpush1.msra.mxu0 %v320
        %340 = vmatprep.subr.mxu0 0.0
        %341 = vmatpush1.msra.mxu0 %v321
        %342 = vmatprep.subr.mxu0 0.0
        %343 = vmatpush1.msra.mxu0 %v322
        %344 = vmatprep.subr.mxu0 0.0
        %345 = vmatpush1.msra.mxu0 %v323
        %346 = vmatprep.subr.mxu0 0.0
        %347 = vmatpush1.msra.mxu0 %v324
        %348 = vmatprep.subr.mxu0 0.0
        %349 = vmatpush1.msra.mxu0 %v325
        %350 = vmatprep.subr.mxu0 0.0
        %351 = vmatpush1.msra.mxu0 %v326
        %352 = vmatprep.subr.mxu0 0.0
        %353 = vmatpush1.msra.mxu0 %v327
        %354 = vmatprep.subr.mxu0 0.0
        %355 = vmatpush1.msra.mxu0 %v328
        %356 = vmatprep.subr.mxu0 0.0
        %357 = vmatpush1.msra.mxu0 %v329
        %358 = vmatprep.subr.mxu0 0.0
        %359 = vmatpush1.msra.mxu0 %v330
        %360 = vmatprep.subr.mxu0 0.0
        %361 = vmatpush1.msra.mxu0 %v331
        %362 = vmatprep.subr.mxu0 0.0
        %363 = vmatpush1.msra.mxu0 %v332
        %364 = vmatprep.subr.mxu0 0.0
        %365 = vmatpush1.msra.mxu0 %v333
        %366 = vmatprep.subr.mxu0 0.0
        %367 = vmatpush1.msra.mxu0 0.0
        %368 = vmatprep.subr.mxu0 0.0
        %369 = vmatpush1.msra.mxu0 0.0
        %370 = vmatprep.subr.mxu0 0.0
        %371 = vmatpush1.msra.mxu0 0.0
        %372 = vmatprep.subr.mxu0 0.0
        %373 = vmatpush1.msra.mxu0 0.0
        %374 = vmatprep.subr.mxu0 0.0
        %375 = vmatpush1.msra.mxu0 0.0
        %376 = vmatprep.subr.mxu0 0.0
        %377 = vmatpush1.msra.mxu0 0.0
        %378 = vmatprep.subr.mxu0 0.0
        %379 = vmatpush1.msra.mxu0 0.0
        %380 = vmatprep.subr.mxu0 0.0
        %381 = vmatpush1.msra.mxu0 0.0
        %382 = vmatprep.subr.mxu0 0.0
        %383 = vmatpush1.msra.mxu0 0.0
        %384 = vmatprep.subr.mxu0 0.0
        %385 = vmatpush1.msra.mxu0 0.0
        %386 = vmatprep.subr.mxu0 0.0
        %387 = vmatpush1.msra.mxu0 0.0
        %388 = vmatprep.subr.mxu0 0.0
        %389 = vmatpush1.msra.mxu0 0.0
        %390 = vmatprep.subr.mxu0 0.0
        %391 = vmatpush1.msra.mxu0 0.0
        %392 = vmatprep.subr.mxu0 0.0
        %393 = vmatpush1.msra.mxu0 0.0
        %394 = vmatprep.subr.mxu0 0.0
        %395 = vmatpush1.msra.mxu0 0.0
        %396 = vmatprep.subr.mxu0 0.0
        %397 = vmatpush1.msra.mxu0 0.0
        %398 = vmatprep.mubr.f32.mxu0 0.0
        %399 = vmatmul.mubr.f32.gmra.mrb[0].mxu0 %v314
        %v400 = vpop.f32.mrb[0].mxu0
        %v401 = vadd.f32 0.0, %v400
        %v402 = vpop.f32.mrb[0].mxu0
        %403 = vmatprep.mubr.f32.mxu0 0.0
        %404 = vmatmul.mubr.f32.gmra.mrb[0].mxu0 %v315
        %v405 = vpop.f32.mrb[0].mxu0
        %v406 = vadd.f32 0.0, %v405
        %v407 = vpop.f32.mrb[0].mxu0
        %408 = vmatprep.mubr.f32.mxu0 0.0
        %409 = vmatmul.mubr.f32.gmra.mrb[0].mxu0 %v316
        %v410 = vpop.f32.mrb[0].mxu0
        %v411 = vadd.f32 0.0, %v410
        %v412 = vpop.f32.mrb[0].mxu0
        %413 = vdwg.mxu0
        %414 = vmatprep.subr.mxu0 0.0
        %415 = vmatpush1.msra.mxu0 %v298
        %416 = vmatprep.subr.mxu0 0.0
        %417 = vmatpush1.msra.mxu0 %v299
        %418 = vmatprep.subr.mxu0 0.0
        %419 = vmatpush1.msra.mxu0 %v300
        %420 = vmatprep.subr.mxu0 0.0
        %421 = vmatpush1.msra.mxu0 %v301
        %422 = vmatprep.subr.mxu0 0.0
        %423 = vmatpush1.msra.mxu0 %v302
        %424 = vmatprep.subr.mxu0 0.0
        %425 = vmatpush1.msra.mxu0 %v303
        %426 = vmatprep.subr.mxu0 0.0
        %427 = vmatpush1.msra.mxu0 %v304
        %428 = vmatprep.subr.mxu0 0.0
        %429 = vmatpush1.msra.mxu0 %v305
        %430 = vmatprep.subr.mxu0 0.0
        %431 = vmatpush1.msra.mxu0 %v306
        %432 = vmatprep.subr.mxu0 0.0
        %433 = vmatpush1.msra.mxu0 %v307
        %434 = vmatprep.subr.mxu0 0.0
        %435 = vmatpush1.msra.mxu0 %v308
        %436 = vmatprep.subr.mxu0 0.0
        %437 = vmatpush1.msra.mxu0 %v309
        %438 = vmatprep.subr.mxu0 0.0
        %439 = vmatpush1.msra.mxu0 %v310
        %440 = vmatprep.subr.mxu0 0.0
        %441 = vmatpush1.msra.mxu0 %v311
        %442 = vmatprep.subr.mxu0 0.0
        %443 = vmatpush1.msra.mxu0 %v312
        %444 = vmatprep.subr.mxu0 0.0
        %445 = vmatpush1.msra.mxu0 %v313
        %446 = vmatprep.subr.mxu0 0.0
        %447 = vmatpush1.msra.mxu0 0.0
        %448 = vmatprep.subr.mxu0 0.0
        %449 = vmatpush1.msra.mxu0 0.0
        %450 = vmatprep.subr.mxu0 0.0
        %451 = vmatpush1.msra.mxu0 0.0
        %452 = vmatprep.subr.mxu0 0.0
        %453 = vmatpush1.msra.mxu0 0.0
        %454 = vmatprep.subr.mxu0 0.0
        %455 = vmatpush1.msra.mxu0 0.0
        %456 = vmatprep.subr.mxu0 0.0
        %457 = vmatpush1.msra.mxu0 0.0
        %458 = vmatprep.subr.mxu0 0.0
        %459 = vmatpush1.msra.mxu0 0.0
        %460 = vmatprep.subr.mxu0 0.0
        %461 = vmatpush1.msra.mxu0 0.0
        %462 = vmatprep.subr.mxu0 0.0
        %463 = vmatpush1.msra.mxu0 0.0
        %464 = vmatprep.subr.mxu0 0.0
        %465 = vmatpush1.msra.mxu0 0.0
        %466 = vmatprep.subr.mxu0 0.0
        %467 = vmatpush1.msra.mxu0 0.0
        %468 = vmatprep.subr.mxu0 0.0
        %469 = vmatpush1.msra.mxu0 0.0
        %470 = vmatprep.subr.mxu0 0.0
        %471 = vmatpush1.msra.mxu0 0.0
        %472 = vmatprep.subr.mxu0 0.0
        %473 = vmatpush1.msra.mxu0 0.0
        %474 = vmatprep.subr.mxu0 0.0
        %475 = vmatpush1.msra.mxu0 0.0
        %476 = vmatprep.subr.mxu0 0.0
        %477 = vmatpush1.msra.mxu0 0.0
        %478 = vmatprep.mubr.f32.mxu0 0.0
        %479 = vmatmul.mubr.f32.gmra.mrb[0].mxu0 %v295
        %v480 = vpop.f32.mrb[0].mxu0
        %v481 = vadd.f32 %v401, %v480
        %v482 = vpop.f32.mrb[0].mxu0
        %483 = vmatprep.mubr.f32.mxu0 0.0
        %484 = vmatmul.mubr.f32.gmra.mrb[0].mxu0 %v296
        %v485 = vpop.f32.mrb[0].mxu0
        %v486 = vadd.f32 %v406, %v485
        %v487 = vpop.f32.mrb[0].mxu0
        %488 = vmatprep.mubr.f32.mxu0 0.0
        %489 = vmatmul.mubr.f32.gmra.mrb[0].mxu0 %v297
        %v490 = vpop.f32.mrb[0].mxu0
        %v491 = vadd.f32 %v411, %v490
        %v492 = vpop.f32.mrb[0].mxu0
        %493 = vdwg.mxu0
        %v494 = vld [vmem:[#allocation2 + $0x2] sm:$0xff]
        %v495 = vld [vmem:[#allocation2 + $0xa] sm:$0xff]
        %v496 = vld [vmem:[#allocation2 + $0x12] sm:$0xff]
        %s497 = scalar_lea.vmem [#allocation4], 256
        %v498 = vld [vmem:[%s497] sm:$0xff]
        %v499 = vld [vmem:[%s497 + $0x8] sm:$0xff]
        %v500 = vld [vmem:[%s497 + $0x10] sm:$0xff]
        %v501 = vld [vmem:[%s497 + $0x18] sm:$0xff]
        %v502 = vld [vmem:[%s497 + $0x20] sm:$0xff]
        %v503 = vld [vmem:[%s497 + $0x28] sm:$0xff]
        %v504 = vld [vmem:[%s497 + $0x30] sm:$0xff]
        %v505 = vld [vmem:[%s497 + $0x38] sm:$0xff]
        %v506 = vld [vmem:[%s497 + $0x40] sm:$0xff]
        %v507 = vld [vmem:[%s497 + $0x48] sm:$0xff]
        %v508 = vld [vmem:[%s497 + $0x50] sm:$0xff]
        %v509 = vld [vmem:[%s497 + $0x58] sm:$0xff]
        %v510 = vld [vmem:[%s497 + $0x60] sm:$0xff]
        %v511 = vld [vmem:[%s497 + $0x68] sm:$0xff]
        %v512 = vld [vmem:[%s497 + $0x70] sm:$0xff]
        %v513 = vld [vmem:[%s497 + $0x78] sm:$0xff]
        %514 = vmatprep.subr.mxu0 0.0
        %515 = vmatpush1.msra.mxu0 %v498
        %516 = vmatprep.subr.mxu0 0.0
        %517 = vmatpush1.msra.mxu0 %v499
        %518 = vmatprep.subr.mxu0 0.0
        %519 = vmatpush1.msra.mxu0 %v500
        %520 = vmatprep.subr.mxu0 0.0
        %521 = vmatpush1.msra.mxu0 %v501
        %522 = vmatprep.subr.mxu0 0.0
        %523 = vmatpush1.msra.mxu0 %v502
        %524 = vmatprep.subr.mxu0 0.0
        %525 = vmatpush1.msra.mxu0 %v503
        %526 = vmatprep.subr.mxu0 0.0
        %527 = vmatpush1.msra.mxu0 %v504
        %528 = vmatprep.subr.mxu0 0.0
        %529 = vmatpush1.msra.mxu0 %v505
        %530 = vmatprep.subr.mxu0 0.0
        %531 = vmatpush1.msra.mxu0 %v506
        %532 = vmatprep.subr.mxu0 0.0
        %533 = vmatpush1.msra.mxu0 %v507
        %534 = vmatprep.subr.mxu0 0.0
        %535 = vmatpush1.msra.mxu0 %v508
        %536 = vmatprep.subr.mxu0 0.0
        %537 = vmatpush1.msra.mxu0 %v509
        %538 = vmatprep.subr.mxu0 0.0
        %539 = vmatpush1.msra.mxu0 %v510
        %540 = vmatprep.subr.mxu0 0.0
        %541 = vmatpush1.msra.mxu0 %v511
        %542 = vmatprep.subr.mxu0 0.0
        %543 = vmatpush1.msra.mxu0 %v512
        %544 = vmatprep.subr.mxu0 0.0
        %545 = vmatpush1.msra.mxu0 %v513
        %546 = vmatprep.subr.mxu0 0.0
        %547 = vmatpush1.msra.mxu0 0.0
        %548 = vmatprep.subr.mxu0 0.0
        %549 = vmatpush1.msra.mxu0 0.0
        %550 = vmatprep.subr.mxu0 0.0
        %551 = vmatpush1.msra.mxu0 0.0
        %552 = vmatprep.subr.mxu0 0.0
        %553 = vmatpush1.msra.mxu0 0.0
        %554 = vmatprep.subr.mxu0 0.0
        %555 = vmatpush1.msra.mxu0 0.0
        %556 = vmatprep.subr.mxu0 0.0
        %557 = vmatpush1.msra.mxu0 0.0
        %558 = vmatprep.subr.mxu0 0.0
        %559 = vmatpush1.msra.mxu0 0.0
        %560 = vmatprep.subr.mxu0 0.0
        %561 = vmatpush1.msra.mxu0 0.0
        %562 = vmatprep.subr.mxu0 0.0
        %563 = vmatpush1.msra.mxu0 0.0
        %564 = vmatprep.subr.mxu0 0.0
        %565 = vmatpush1.msra.mxu0 0.0
        %566 = vmatprep.subr.mxu0 0.0
        %567 = vmatpush1.msra.mxu0 0.0
        %568 = vmatprep.subr.mxu0 0.0
        %569 = vmatpush1.msra.mxu0 0.0
        %570 = vmatprep.subr.mxu0 0.0
        %571 = vmatpush1.msra.mxu0 0.0
        %572 = vmatprep.subr.mxu0 0.0
        %573 = vmatpush1.msra.mxu0 0.0
        %574 = vmatprep.subr.mxu0 0.0
        %575 = vmatpush1.msra.mxu0 0.0
        %576 = vmatprep.subr.mxu0 0.0
        %577 = vmatpush1.msra.mxu0 0.0
        %578 = vmatprep.mubr.f32.mxu0 0.0
        %579 = vmatmul.mubr.f32.gmra.mrb[0].mxu0 %v494
        %v580 = vpop.f32.mrb[0].mxu0
        %v581 = vadd.f32 0.0, %v580
        %v582 = vpop.f32.mrb[0].mxu0
        %583 = vmatprep.mubr.f32.mxu0 0.0
        %584 = vmatmul.mubr.f32.gmra.mrb[0].mxu0 %v495
        %v585 = vpop.f32.mrb[0].mxu0
        %v586 = vadd.f32 0.0, %v585
        %v587 = vpop.f32.mrb[0].mxu0
        %588 = vmatprep.mubr.f32.mxu0 0.0
        %589 = vmatmul.mubr.f32.gmra.mrb[0].mxu0 %v496
        %v590 = vpop.f32.mrb[0].mxu0
        %v591 = vadd.f32 0.0, %v590
        %v592 = vpop.f32.mrb[0].mxu0
        %593 = vdwg.mxu0
        %v594 = vadd.f32 %v481, %v581
        %v595 = vadd.f32 %v486, %v586
        %v596 = vadd.f32 %v491, %v591
        %v597 = vld [vmem:[%s2] sm:$0x1]
        %v599 = vlaneseq
        %v600 = vshrl.u32 %v599, 7
        %v601 = vsub.s32 0, %v600
        %v602 = vrot.slane %v597, %v601
        %v604 = vadd.f32 %v594, %v602
        %v605 = vadd.f32 %v595, %v602
        %v606 = vadd.f32 %v596, %v602
        %vm607 = vcmp.gt.f32.partialorder %v604, 0.0
        %vm608 = vcmp.gt.f32.partialorder %v605, 0.0
        %vm609 = vcmp.gt.f32.partialorder %v606, 0.0
        %v610 = vmul.f32 %v604, 0.2
        %v611 = vmul.f32 %v605, 0.2
        %v612 = vmul.f32 %v606, 0.2
        %v613 = vsel %vm607, %v604, %v610
        %v614 = vsel %vm608, %v605, %v611
        %v615 = vsel %vm609, %v606, %v612
        %v616 = vlaneseq
        %v617 = vshrl.u32 %v616, 7
        %v618 = vadd.s32 %v617, 8
        %v619 = vadd.s32 %v617, 16
        %s620 = smul.u32 %s26, 16
        %s621 = ssub.s32 %s620, 1
        %v622 = vstv %s621
        %v623 = vadd.s32 %v622, %v617
        %v624 = vadd.s32 %v622, %v618
        %v625 = vadd.s32 %v622, %v619
        %vm626 = vcmp.ge.s32.totalorder %v623, 0
        %vm627 = vcmp.ge.s32.totalorder %v624, 0
        %vm628 = vcmp.ge.s32.totalorder %v625, 0
        %vm629 = vcmp.lt.s32.totalorder %v623, 16
        %vm630 = vcmp.lt.s32.totalorder %v624, 16
        %vm631 = vcmp.lt.s32.totalorder %v625, 16
        %vm632 = vmand %vm626, %vm629
        %vm633 = vmand %vm627, %vm630
        %vm634 = vmand %vm628, %vm631
        %v635 = vsel %vm632, 1, 0
        %v636 = vsel %vm633, 1, 0
        %v637 = vsel %vm634, 1, 0
        %vm638 = vcmp.eq.s32.totalorder %v635, 1
        %vm639 = vcmp.eq.s32.totalorder %v636, 1
        %vm640 = vcmp.eq.s32.totalorder %v637, 1
        %v641 = vsel %vm638, %v613, 0.0
        %v642 = vsel %vm639, %v614, 0.0
        %v643 = vsel %vm640, %v615, 0.0
        %644 = vst [vmem:[#allocation3] sm:$0xff] %v641
        %645 = vst [vmem:[#allocation3 + $0x8] sm:$0xff] %v642
        %646 = vst [vmem:[#allocation3 + $0x10] sm:$0xff] %v643
        %v647 = vld [vmem:[#allocation3] sm:$0xff]
        %v648 = vld [vmem:[#allocation3 + $0x8] sm:$0xff]
        %v649 = vld [vmem:[#allocation7] sm:$0xff]
        %v650 = vld [vmem:[#allocation7 + $0x8] sm:$0xff]
        %v651 = vld [vmem:[#allocation7 + $0x10] sm:$0xff]
        %v652 = vld [vmem:[#allocation7 + $0x18] sm:$0xff]
        %v653 = vld [vmem:[#allocation7 + $0x20] sm:$0xff]
        %v654 = vld [vmem:[#allocation7 + $0x28] sm:$0xff]
        %v655 = vld [vmem:[#allocation7 + $0x30] sm:$0xff]
        %v656 = vld [vmem:[#allocation7 + $0x38] sm:$0xff]
        %v657 = vld [vmem:[#allocation7 + $0x40] sm:$0xff]
        %v658 = vld [vmem:[#allocation7 + $0x48] sm:$0xff]
        %v659 = vld [vmem:[#allocation7 + $0x50] sm:$0xff]
        %v660 = vld [vmem:[#allocation7 + $0x58] sm:$0xff]
        %v661 = vld [vmem:[#allocation7 + $0x60] sm:$0xff]
        %v662 = vld [vmem:[#allocation7 + $0x68] sm:$0xff]
        %v663 = vld [vmem:[#allocation7 + $0x70] sm:$0xff]
        %v664 = vld [vmem:[#allocation7 + $0x78] sm:$0xff]
        %v665 = vld [vmem:[#allocation3 + $0x1] sm:$0xff]
        %v666 = vld [vmem:[#allocation3 + $0x9] sm:$0xff]
        %s667 = scalar_lea.vmem [#allocation7], 128
        %v668 = vld [vmem:[%s667] sm:$0xff]
        %v669 = vld [vmem:[%s667 + $0x8] sm:$0xff]
        %v670 = vld [vmem:[%s667 + $0x10] sm:$0xff]
        %v671 = vld [vmem:[%s667 + $0x18] sm:$0xff]
        %v672 = vld [vmem:[%s667 + $0x20] sm:$0xff]
        %v673 = vld [vmem:[%s667 + $0x28] sm:$0xff]
        %v674 = vld [vmem:[%s667 + $0x30] sm:$0xff]
        %v675 = vld [vmem:[%s667 + $0x38] sm:$0xff]
        %v676 = vld [vmem:[%s667 + $0x40] sm:$0xff]
        %v677 = vld [vmem:[%s667 + $0x48] sm:$0xff]
        %v678 = vld [vmem:[%s667 + $0x50] sm:$0xff]
        %v679 = vld [vmem:[%s667 + $0x58] sm:$0xff]
        %v680 = vld [vmem:[%s667 + $0x60] sm:$0xff]
        %v681 = vld [vmem:[%s667 + $0x68] sm:$0xff]
        %v682 = vld [vmem:[%s667 + $0x70] sm:$0xff]
        %v683 = vld [vmem:[%s667 + $0x78] sm:$0xff]
        %684 = vmatprep.subr.mxu0 0.0
        %685 = vmatpush1.msra.mxu0 %v668
        %686 = vmatprep.subr.mxu0 0.0
        %687 = vmatpush1.msra.mxu0 %v669
        %688 = vmatprep.subr.mxu0 0.0
        %689 = vmatpush1.msra.mxu0 %v670
        %690 = vmatprep.subr.mxu0 0.0
        %691 = vmatpush1.msra.mxu0 %v671
        %692 = vmatprep.subr.mxu0 0.0
        %693 = vmatpush1.msra.mxu0 %v672
        %694 = vmatprep.subr.mxu0 0.0
        %695 = vmatpush1.msra.mxu0 %v673
        %696 = vmatprep.subr.mxu0 0.0
        %697 = vmatpush1.msra.mxu0 %v674
        %698 = vmatprep.subr.mxu0 0.0
        %699 = vmatpush1.msra.mxu0 %v675
        %700 = vmatprep.subr.mxu0 0.0
        %701 = vmatpush1.msra.mxu0 %v676
        %702 = vmatprep.subr.mxu0 0.0
        %703 = vmatpush1.msra.mxu0 %v677
        %704 = vmatprep.subr.mxu0 0.0
        %705 = vmatpush1.msra.mxu0 %v678
        %706 = vmatprep.subr.mxu0 0.0
        %707 = vmatpush1.msra.mxu0 %v679
        %708 = vmatprep.subr.mxu0 0.0
        %709 = vmatpush1.msra.mxu0 %v680
        %710 = vmatprep.subr.mxu0 0.0
        %711 = vmatpush1.msra.mxu0 %v681
        %712 = vmatprep.subr.mxu0 0.0
        %713 = vmatpush1.msra.mxu0 %v682
        %714 = vmatprep.subr.mxu0 0.0
        %715 = vmatpush1.msra.mxu0 %v683
        %716 = vmatprep.subr.mxu0 0.0
        %717 = vmatpush1.msra.mxu0 0.0
        %718 = vmatprep.subr.mxu0 0.0
        %719 = vmatpush1.msra.mxu0 0.0
        %720 = vmatprep.subr.mxu0 0.0
        %721 = vmatpush1.msra.mxu0 0.0
        %722 = vmatprep.subr.mxu0 0.0
        %723 = vmatpush1.msra.mxu0 0.0
        %724 = vmatprep.subr.mxu0 0.0
        %725 = vmatpush1.msra.mxu0 0.0
        %726 = vmatprep.subr.mxu0 0.0
        %727 = vmatpush1.msra.mxu0 0.0
        %728 = vmatprep.subr.mxu0 0.0
        %729 = vmatpush1.msra.mxu0 0.0
        %730 = vmatprep.subr.mxu0 0.0
        %731 = vmatpush1.msra.mxu0 0.0
        %732 = vmatprep.subr.mxu0 0.0
        %733 = vmatpush1.msra.mxu0 0.0
        %734 = vmatprep.subr.mxu0 0.0
        %735 = vmatpush1.msra.mxu0 0.0
        %736 = vmatprep.subr.mxu0 0.0
        %737 = vmatpush1.msra.mxu0 0.0
        %738 = vmatprep.subr.mxu0 0.0
        %739 = vmatpush1.msra.mxu0 0.0
        %740 = vmatprep.subr.mxu0 0.0
        %741 = vmatpush1.msra.mxu0 0.0
        %742 = vmatprep.subr.mxu0 0.0
        %743 = vmatpush1.msra.mxu0 0.0
        %744 = vmatprep.subr.mxu0 0.0
        %745 = vmatpush1.msra.mxu0 0.0
        %746 = vmatprep.subr.mxu0 0.0
        %747 = vmatpush1.msra.mxu0 0.0
        %748 = vmatprep.mubr.f32.mxu0 0.0
        %749 = vmatmul.mubr.f32.gmra.mrb[0].mxu0 %v665
        %v750 = vpop.f32.mrb[0].mxu0
        %v751 = vadd.f32 0.0, %v750
        %v752 = vpop.f32.mrb[0].mxu0
        %753 = vmatprep.mubr.f32.mxu0 0.0
        %754 = vmatmul.mubr.f32.gmra.mrb[0].mxu0 %v666
        %v755 = vpop.f32.mrb[0].mxu0
        %v756 = vadd.f32 0.0, %v755
        %v757 = vpop.f32.mrb[0].mxu0
        %758 = vdwg.mxu0
        %759 = vmatprep.subr.mxu0 0.0
        %760 = vmatpush1.msra.mxu0 %v649
        %761 = vmatprep.subr.mxu0 0.0
        %762 = vmatpush1.msra.mxu0 %v650
        %763 = vmatprep.subr.mxu0 0.0
        %764 = vmatpush1.msra.mxu0 %v651
        %765 = vmatprep.subr.mxu0 0.0
        %766 = vmatpush1.msra.mxu0 %v652
        %767 = vmatprep.subr.mxu0 0.0
        %768 = vmatpush1.msra.mxu0 %v653
        %769 = vmatprep.subr.mxu0 0.0
        %770 = vmatpush1.msra.mxu0 %v654
        %771 = vmatprep.subr.mxu0 0.0
        %772 = vmatpush1.msra.mxu0 %v655
        %773 = vmatprep.subr.mxu0 0.0
        %774 = vmatpush1.msra.mxu0 %v656
        %775 = vmatprep.subr.mxu0 0.0
        %776 = vmatpush1.msra.mxu0 %v657
        %777 = vmatprep.subr.mxu0 0.0
        %778 = vmatpush1.msra.mxu0 %v658
        %779 = vmatprep.subr.mxu0 0.0
        %780 = vmatpush1.msra.mxu0 %v659
        %781 = vmatprep.subr.mxu0 0.0
        %782 = vmatpush1.msra.mxu0 %v660
        %783 = vmatprep.subr.mxu0 0.0
        %784 = vmatpush1.msra.mxu0 %v661
        %785 = vmatprep.subr.mxu0 0.0
        %786 = vmatpush1.msra.mxu0 %v662
        %787 = vmatprep.subr.mxu0 0.0
        %788 = vmatpush1.msra.mxu0 %v663
        %789 = vmatprep.subr.mxu0 0.0
        %790 = vmatpush1.msra.mxu0 %v664
        %791 = vmatprep.subr.mxu0 0.0
        %792 = vmatpush1.msra.mxu0 0.0
        %793 = vmatprep.subr.mxu0 0.0
        %794 = vmatpush1.msra.mxu0 0.0
        %795 = vmatprep.subr.mxu0 0.0
        %796 = vmatpush1.msra.mxu0 0.0
        %797 = vmatprep.subr.mxu0 0.0
        %798 = vmatpush1.msra.mxu0 0.0
        %799 = vmatprep.subr.mxu0 0.0
        %800 = vmatpush1.msra.mxu0 0.0
        %801 = vmatprep.subr.mxu0 0.0
        %802 = vmatpush1.msra.mxu0 0.0
        %803 = vmatprep.subr.mxu0 0.0
        %804 = vmatpush1.msra.mxu0 0.0
        %805 = vmatprep.subr.mxu0 0.0
        %806 = vmatpush1.msra.mxu0 0.0
        %807 = vmatprep.subr.mxu0 0.0
        %808 = vmatpush1.msra.mxu0 0.0
        %809 = vmatprep.subr.mxu0 0.0
        %810 = vmatpush1.msra.mxu0 0.0
        %811 = vmatprep.subr.mxu0 0.0
        %812 = vmatpush1.msra.mxu0 0.0
        %813 = vmatprep.subr.mxu0 0.0
        %814 = vmatpush1.msra.mxu0 0.0
        %815 = vmatprep.subr.mxu0 0.0
        %816 = vmatpush1.msra.mxu0 0.0
        %817 = vmatprep.subr.mxu0 0.0
        %818 = vmatpush1.msra.mxu0 0.0
        %819 = vmatprep.subr.mxu0 0.0
        %820 = vmatpush1.msra.mxu0 0.0
        %821 = vmatprep.subr.mxu0 0.0
        %822 = vmatpush1.msra.mxu0 0.0
        %823 = vmatprep.mubr.f32.mxu0 0.0
        %824 = vmatmul.mubr.f32.gmra.mrb[0].mxu0 %v647
        %v825 = vpop.f32.mrb[0].mxu0
        %v826 = vadd.f32 %v751, %v825
        %v827 = vpop.f32.mrb[0].mxu0
        %828 = vmatprep.mubr.f32.mxu0 0.0
        %829 = vmatmul.mubr.f32.gmra.mrb[0].mxu0 %v648
        %v830 = vpop.f32.mrb[0].mxu0
        %v831 = vadd.f32 %v756, %v830
        %v832 = vpop.f32.mrb[0].mxu0
        %833 = vdwg.mxu0
        %v834 = vld [vmem:[#allocation3 + $0x2] sm:$0xff]
        %v835 = vld [vmem:[#allocation3 + $0xa] sm:$0xff]
        %s836 = scalar_lea.vmem [#allocation7], 256
        %v837 = vld [vmem:[%s836] sm:$0xff]
        %v838 = vld [vmem:[%s836 + $0x8] sm:$0xff]
        %v839 = vld [vmem:[%s836 + $0x10] sm:$0xff]
        %v840 = vld [vmem:[%s836 + $0x18] sm:$0xff]
        %v841 = vld [vmem:[%s836 + $0x20] sm:$0xff]
        %v842 = vld [vmem:[%s836 + $0x28] sm:$0xff]
        %v843 = vld [vmem:[%s836 + $0x30] sm:$0xff]
        %v844 = vld [vmem:[%s836 + $0x38] sm:$0xff]
        %v845 = vld [vmem:[%s836 + $0x40] sm:$0xff]
        %v846 = vld [vmem:[%s836 + $0x48] sm:$0xff]
        %v847 = vld [vmem:[%s836 + $0x50] sm:$0xff]
        %v848 = vld [vmem:[%s836 + $0x58] sm:$0xff]
        %v849 = vld [vmem:[%s836 + $0x60] sm:$0xff]
        %v850 = vld [vmem:[%s836 + $0x68] sm:$0xff]
        %v851 = vld [vmem:[%s836 + $0x70] sm:$0xff]
        %v852 = vld [vmem:[%s836 + $0x78] sm:$0xff]
        %853 = vmatprep.subr.mxu0 0.0
        %854 = vmatpush1.msra.mxu0 %v837
        %855 = vmatprep.subr.mxu0 0.0
        %856 = vmatpush1.msra.mxu0 %v838
        %857 = vmatprep.subr.mxu0 0.0
        %858 = vmatpush1.msra.mxu0 %v839
        %859 = vmatprep.subr.mxu0 0.0
        %860 = vmatpush1.msra.mxu0 %v840
        %861 = vmatprep.subr.mxu0 0.0
        %862 = vmatpush1.msra.mxu0 %v841
        %863 = vmatprep.subr.mxu0 0.0
        %864 = vmatpush1.msra.mxu0 %v842
        %865 = vmatprep.subr.mxu0 0.0
        %866 = vmatpush1.msra.mxu0 %v843
        %867 = vmatprep.subr.mxu0 0.0
        %868 = vmatpush1.msra.mxu0 %v844
        %869 = vmatprep.subr.mxu0 0.0
        %870 = vmatpush1.msra.mxu0 %v845
        %871 = vmatprep.subr.mxu0 0.0
        %872 = vmatpush1.msra.mxu0 %v846
        %873 = vmatprep.subr.mxu0 0.0
        %874 = vmatpush1.msra.mxu0 %v847
        %875 = vmatprep.subr.mxu0 0.0
        %876 = vmatpush1.msra.mxu0 %v848
        %877 = vmatprep.subr.mxu0 0.0
        %878 = vmatpush1.msra.mxu0 %v849
        %879 = vmatprep.subr.mxu0 0.0
        %880 = vmatpush1.msra.mxu0 %v850
        %881 = vmatprep.subr.mxu0 0.0
        %882 = vmatpush1.msra.mxu0 %v851
        %883 = vmatprep.subr.mxu0 0.0
        %884 = vmatpush1.msra.mxu0 %v852
        %885 = vmatprep.subr.mxu0 0.0
        %886 = vmatpush1.msra.mxu0 0.0
        %887 = vmatprep.subr.mxu0 0.0
        %888 = vmatpush1.msra.mxu0 0.0
        %889 = vmatprep.subr.mxu0 0.0
        %890 = vmatpush1.msra.mxu0 0.0
        %891 = vmatprep.subr.mxu0 0.0
        %892 = vmatpush1.msra.mxu0 0.0
        %893 = vmatprep.subr.mxu0 0.0
        %894 = vmatpush1.msra.mxu0 0.0
        %895 = vmatprep.subr.mxu0 0.0
        %896 = vmatpush1.msra.mxu0 0.0
        %897 = vmatprep.subr.mxu0 0.0
        %898 = vmatpush1.msra.mxu0 0.0
        %899 = vmatprep.subr.mxu0 0.0
        %900 = vmatpush1.msra.mxu0 0.0
        %901 = vmatprep.subr.mxu0 0.0
        %902 = vmatpush1.msra.mxu0 0.0
        %903 = vmatprep.subr.mxu0 0.0
        %904 = vmatpush1.msra.mxu0 0.0
        %905 = vmatprep.subr.mxu0 0.0
        %906 = vmatpush1.msra.mxu0 0.0
        %907 = vmatprep.subr.mxu0 0.0
        %908 = vmatpush1.msra.mxu0 0.0
        %909 = vmatprep.subr.mxu0 0.0
        %910 = vmatpush1.msra.mxu0 0.0
        %911 = vmatprep.subr.mxu0 0.0
        %912 = vmatpush1.msra.mxu0 0.0
        %913 = vmatprep.subr.mxu0 0.0
        %914 = vmatpush1.msra.mxu0 0.0
        %915 = vmatprep.subr.mxu0 0.0
        %916 = vmatpush1.msra.mxu0 0.0
        %917 = vmatprep.mubr.f32.mxu0 0.0
        %918 = vmatmul.mubr.f32.gmra.mrb[0].mxu0 %v834
        %v919 = vpop.f32.mrb[0].mxu0
        %v920 = vadd.f32 0.0, %v919
        %v921 = vpop.f32.mrb[0].mxu0
        %922 = vmatprep.mubr.f32.mxu0 0.0
        %923 = vmatmul.mubr.f32.gmra.mrb[0].mxu0 %v835
        %v924 = vpop.f32.mrb[0].mxu0
        %v925 = vadd.f32 0.0, %v924
        %v926 = vpop.f32.mrb[0].mxu0
        %927 = vdwg.mxu0
        %v928 = vadd.f32 %v826, %v920
        %v929 = vadd.f32 %v831, %v925
        %v930 = vld [vmem:[%s4] sm:$0x1]
        %v932 = vlaneseq
        %v933 = vshrl.u32 %v932, 7
        %v934 = vsub.s32 0, %v933
        %v935 = vrot.slane %v930, %v934
        %v937 = vadd.f32 %v928, %v935
        %v938 = vadd.f32 %v929, %v935
        %939 = vst [vmem:[%s271] sm:$0xff] %v937
        %940 = vst [vmem:[%s271 + $0x8] sm:$0xff] %v938
        %s941 = sand.u32 %s155, 1
        %s942 = scalar_lea.sflag [#allocation6], %s941
        %s943 = sand.u32 %s155, 1
        %s944 = smul.addr %s943, 16
        %s945 = scalar_lea.vmem [#allocation9], %s944
        // Predicated region
        $region49: #{tpu_custom_call.1} parent=39 // pred_check
          %p946 = pneg %p165
        $region50: #{tpu_custom_call.1} parent=39 // pred_check_branch
          %948 = sbr.rel (%p946) target = $region52
        $region51: #{tpu_custom_call.1} parent=39 // pred_region
          %s949 = smul.u32 2, %s26
          %s951 = ssub.s32 256, 256
          %952 = vsyncadd %s942, %s951
          %s953 = smul.addr %s25, 2
          %s954 = sadd.s32 %s949, %s953
          %s955 = smul.addr %s954, 128
          %s956 = scalar_lea.hbm %s5, %s955
          %s957 = sshll.u32 %s945, 4
          %s958 = int_to_ptr.vmem [resolvable:$true] %s957
          %963 = dma.vmem_to_hbm [thread:$0]  %s958, 256, %s956, %s942, 128, 128, 8
        $region52: #{tpu_custom_call.1} parent=39 // pred_fallthru
          _
      $region40: #{tpu_custom_call.1} parent=5 // pred_fallthru
        _
      %p964 = scmp.le.s32.totalorder 2, %s16
      // Predicated region
      $region53: #{tpu_custom_call.1} parent=5 // pred_check
        %p965 = pneg %p964
      $region54: #{tpu_custom_call.1} parent=5 // pred_check_branch
        %967 = sbr.rel (%p965) target = $region56
      $region55: #{tpu_custom_call.1} parent=5 // pred_region
        %s968 = ssub.s32 %s16, 2
        // Predicated region
        $region57: #{tpu_custom_call.1} parent=55 // pred_check
          %p969 = pneg %p171
        $region58: #{tpu_custom_call.1} parent=55 // pred_check_branch
          %971 = sbr.rel (%p969) target = $region60
        $region59: #{tpu_custom_call.1} parent=55 // pred_region
          %s972 = sand.u32 %s156, 1
          %s973 = scalar_lea.sflag [#allocation6], %s972
          %s974 = sand.u32 %s156, 1
          %s975 = smul.addr %s974, 16
          %s976 = scalar_lea.vmem [#allocation9], %s975
          %977 = dma.done %s973, 256
        $region60: #{tpu_custom_call.1} parent=55 // pred_fallthru
          _
      $region56: #{tpu_custom_call.1} parent=5 // pred_fallthru
        _
    $region6: #{tpu_custom_call.1} parent=1 // loop_footer
      %s20 = sadd.s32 1, %s16
    $region7: #{tpu_custom_call.1} parent=1 // loop_footer_branch
      %15 = sbr.rel target = $region3
    $region8: #{tpu_custom_call.1} parent=1 // loop_exit
      _
    %978 = vsyncpa [#allocation5], 1
    %s979 = scalar_lea.sflag [#allocation5], 1
    %980 = vsyncpa %s979, 1
    %981 = vsyncpa [#allocation8], 1
    %982 = vsyncpa [#allocation6], 1
    %s983 = scalar_lea.sflag [#allocation6], 1
    %984 = vsyncpa %s983, 1

</llo_original>
